<compile_context>
chip_gen: v7x
topology: tpu7x:2x2x1
jax: 0.10.0
libtpu: 0.0.40
codegen_flags: <defaults>
</compile_context>

<pallas_src>
import functools

import jax
import jax.numpy as jnp
from jax import lax
from jax.experimental import pallas as pl
from jax.experimental.pallas import tpu as pltpu


def _wce_kernel(tgt_ref, w_ref, logits_ref, num_ref, den_ref,
                m_sc, l_sc, picked_sc, roww_sc,
                *, n_rows, n_cols, tile_n, tile_c, rows_ragged, cols_ragged):
    i = pl.program_id(0)      # row-tile index   ("parallel")
    c = pl.program_id(1)      # class-tile index ("arbitrary" reduction axis)
    n_c = pl.num_programs(1)

    # ---- reset per-row-tile online-LSE state at the first class tile -------
    @pl.when(c == 0)
    def _():
        m_sc[...] = jnp.full_like(m_sc, -jnp.inf)
        l_sc[...] = jnp.zeros_like(l_sc)
        picked_sc[...] = jnp.zeros_like(picked_sc)
        roww_sc[...] = jnp.zeros_like(roww_sc)

    logits = logits_ref[...].astype(jnp.float32)         # (tile_n, tile_c)
    tgt = tgt_ref[...]                                    # (tile_n, 1) int32
    w = w_ref[...].astype(jnp.float32)                    # (1, tile_c)

    # Local (within-tile) column index; compare against the shifted target so we
    # avoid a per-element global-index add.
    col_local = lax.broadcasted_iota(jnp.int32, logits.shape, 1)
    onehot = col_local == (tgt - c * tile_c)              # (tile_n, tile_c)

    if cols_ragged:
        # Mask the padded columns of the last class tile (garbage VMEM padding).
        masked = jnp.where(col_local < (n_cols - c * tile_c), logits, -jnp.inf)
    else:
        masked = logits

    # ---- online log-sum-exp over the class axis -----------------------------
    m_prev = m_sc[...]
    m_new = jnp.maximum(m_prev, jnp.max(masked, axis=1, keepdims=True))
    l_sc[...] = (l_sc[...] * jnp.exp(m_prev - m_new)
                 + jnp.sum(jnp.exp(masked - m_new), axis=1, keepdims=True))
    m_sc[...] = m_new

    # ---- target logit & per-row class weight via one-hot (no lane gather) ---
    picked_sc[...] += jnp.sum(jnp.where(onehot, logits, 0.0), axis=1, keepdims=True)
    roww_sc[...] += jnp.sum(jnp.where(onehot, w, 0.0), axis=1, keepdims=True)

    # ---- finalize this row tile after the last class tile -------------------
    @pl.when(c == n_c - 1)
    def _():
        lse = m_sc[...] + jnp.log(l_sc[...])
        nll = lse - picked_sc[...]                        # -log p[target]
        num = roww_sc[...] * nll
        den = roww_sc[...]
        if rows_ragged:
            row = i * tile_n + lax.broadcasted_iota(jnp.int32, (tile_n, 1), 0)
            valid_row = row < n_rows                      # mask ragged last N tile
            num = jnp.where(valid_row, num, 0.0)
            den = jnp.where(valid_row, den, 0.0)
        num_ref[...] = num
        den_ref[...] = den


def acumen_cross_entropy(logits, targets, weights=None, *, tile_n=None, tile_c=None):
    """logits: (N, C) float (f32/bf16); targets: (N,) int; weights: optional (C,)."""
    n, c = logits.shape
    if weights is None:
        # unweighted mean == weighted mean with unit weights (denominator = N)
        weights = jnp.ones((c,), jnp.float32)

    tgt2d = targets.astype(jnp.int32).reshape(n, 1)
    w2d = weights.astype(jnp.float32).reshape(1, c)

    # ---- class-axis tile: full C when small, otherwise a 128-multiple -------
    if tile_c is None:
        tile_c = c if c <= 2048 else 2048
    assert tile_c == c or tile_c % 128 == 0, "tile_c must equal C or be a multiple of 128"

    # ---- row-axis tile: 2 double-buffered logits tiles must stay well under
    #      the scoped-VMEM budget of every generation (v7x has only 64 MiB). ---
    itemsize = jnp.dtype(logits.dtype).itemsize
    if tile_n is None:
        budget = 4 * 1024 * 1024                          # per logits buffer
        tile_n = max(8, min(1024, (budget // (tile_c * itemsize)) // 8 * 8))
    if n <= tile_n:
        tile_n = n                                        # block == full dim is always legal
    assert tile_n == n or tile_n % 8 == 0, "tile_n must equal N or be a multiple of 8"

    grid_n = pl.cdiv(n, tile_n)
    grid_c = pl.cdiv(c, tile_c)
    n_pad = grid_n * tile_n
    rows_ragged = (n % tile_n) != 0
    cols_ragged = (c % tile_c) != 0

    # Explicit VMEM limit sized to the actual tile footprint (with headroom),
    # including the lane-padded int32 targets and the (TILE_N, 1) scratch.
    lane, sub = 128, 8
    est = (2 * tile_n * tile_c * itemsize                 # logits, double-buffered
           + 2 * tile_n * lane * 4                        # targets (lane-padded i32)
           + 2 * sub * max(tile_c, lane) * 4              # class weights (sublane-padded)
           + 2 * 2 * tile_n * lane * 4                    # two partial outputs
           + 4 * tile_n * lane * 4)                       # online-LSE scratch
    vmem_limit = max(16 * 1024 * 1024,
                     min(int(est * 1.5) + (2 << 20), 64 * 1024 * 1024))

    kernel = functools.partial(_wce_kernel, n_rows=n, n_cols=c,
                               tile_n=tile_n, tile_c=tile_c,
                               rows_ragged=rows_ragged, cols_ragged=cols_ragged)

    num_part, den_part = pl.pallas_call(
        kernel,
        out_shape=(jax.ShapeDtypeStruct((n_pad, 1), jnp.float32),
                   jax.ShapeDtypeStruct((n_pad, 1), jnp.float32)),
        grid_spec=pltpu.PrefetchScalarGridSpec(
            num_scalar_prefetch=0,
            grid=(grid_n, grid_c),
            in_specs=[
                pl.BlockSpec((tile_n, 1), lambda i, cc: (i, 0)),        # targets
                pl.BlockSpec((1, tile_c), lambda i, cc: (0, cc)),       # class weights
                pl.BlockSpec((tile_n, tile_c), lambda i, cc: (i, cc)),  # logits (native dtype)
            ],
            out_specs=[
                pl.BlockSpec((tile_n, 1), lambda i, cc: (i, 0)),        # per-row w*nll
                pl.BlockSpec((tile_n, 1), lambda i, cc: (i, 0)),        # per-row w
            ],
            scratch_shapes=[pltpu.VMEM((tile_n, 1), jnp.float32)] * 4,
        ),
        compiler_params=pltpu.CompilerParams(
            dimension_semantics=("parallel", "arbitrary"),
            vmem_limit_bytes=vmem_limit),
    )(tgt2d, w2d, logits)

    # Tiny final reduction in XLA (padded rows contribute exact zeros).
    return jnp.sum(num_part) / jnp.sum(den_part)


def _reference(logits, targets, weights=None):
    logits = logits.astype(jnp.float32)
    n, c = logits.shape
    if weights is None:
        weights = jnp.ones((c,), jnp.float32)
    logp = jax.nn.log_softmax(logits, axis=-1)
    picked = jnp.take_along_axis(logp, targets[:, None].astype(jnp.int32), axis=1)[:, 0]
    w = weights.astype(jnp.float32)[targets]
    return -jnp.sum(w * picked) / jnp.sum(w)


if __name__ == "__main__":
    key = jax.random.PRNGKey(0)
    k1, k2, k3, k4, k5, k6 = jax.random.split(key, 6)

    # Case 1: tiny single-tile f32 batch with explicit class weights.
    N, C = 8, 16
    logits = jax.random.normal(k1, (N, C), dtype=jnp.float32)
    y_true = jax.random.randint(k2, (N,), 0, C, dtype=jnp.int32)
    weights = jnp.linspace(0.5, 1.5, C, dtype=jnp.float32)
    out = jax.block_until_ready(acumen_cross_entropy(logits, y_true, weights))
    ref = _reference(logits, y_true, weights)
    assert jnp.allclose(out, ref, rtol=1e-5, atol=1e-5), (out, ref)

    # Case 2: ragged multi-tile grid (rows and classes both tiled + masked),
    # exercising the online log-sum-exp across class tiles.
    N, C = 20, 200
    logits = jax.random.normal(k3, (N, C), dtype=jnp.float32)
    y_true = jax.random.randint(k4, (N,), 0, C, dtype=jnp.int32)
    weights = jax.random.uniform(k5, (C,), jnp.float32, 0.5, 1.5)
    out = jax.block_until_ready(
        acumen_cross_entropy(logits, y_true, weights, tile_n=8, tile_c=128))
    ref = _reference(logits, y_true, weights)
    assert jnp.allclose(out, ref, rtol=1e-5, atol=1e-5), (out, ref)

    # Case 3: bf16 logits passed straight through (cast per-tile in VMEM),
    # unweighted (weights=None -> plain mean NLL).
    N, C = 16, 32
    logits = jax.random.normal(k6, (N, C), dtype=jnp.float32).astype(jnp.bfloat16)
    y_true = jax.random.randint(k2, (N,), 0, C, dtype=jnp.int32)
    out = jax.block_until_ready(acumen_cross_entropy(logits, y_true, None))
    ref = _reference(logits, y_true, None)
    assert jnp.allclose(out, ref, rtol=1e-4, atol=1e-4), (out, ref)

    print("KERNEL_OK")
</pallas_src>

<mosaic_0001>
module attributes {stable_mosaic.version = 11 : i64} {
  func.func @_wce_kernel(%arg0: i32, %arg1: i32, %arg2: memref<8x1xi32, #tpu.memory_space<vmem>>, %arg3: memref<1x16xf32, #tpu.memory_space<vmem>>, %arg4: memref<8x16xf32, #tpu.memory_space<vmem>>, %arg5: memref<8x1xf32, #tpu.memory_space<vmem>>, %arg6: memref<8x1xf32, #tpu.memory_space<vmem>>, %arg7: memref<8x1xf32, #tpu.memory_space<vmem>>, %arg8: memref<8x1xf32, #tpu.memory_space<vmem>>, %arg9: memref<8x1xf32, #tpu.memory_space<vmem>>, %arg10: memref<8x1xf32, #tpu.memory_space<vmem>>) attributes {dimension_semantics = [#tpu.dimension_semantics<parallel>, #tpu.dimension_semantics<arbitrary>], iteration_bounds = array<i64: 1, 1>, scalar_prefetch = 0 : i64, scratch_operands = 4 : i64, tpu.core_type = #tpu.core_type<tc>, window_params = [{transform_indices = @transform_0, window_bounds = array<i64: 8, 1>}, {transform_indices = @transform_1, window_bounds = array<i64: 1, 16>}, {transform_indices = @transform_2, window_bounds = array<i64: 8, 16>}, {transform_indices = @transform_3, window_bounds = array<i64: 8, 1>}, {transform_indices = @transform_4, window_bounds = array<i64: 8, 1>}]} {
    %c0_i32 = arith.constant 0 : i32
    %0 = arith.cmpi eq, %arg1, %c0_i32 : i32
    %1 = arith.extui %0 : i1 to i32
    %c0_i32_0 = arith.constant 0 : i32
    %2 = arith.cmpi ne, %1, %c0_i32_0 : i32
    scf.if %2 {
      %cst_29 = arith.constant 0xFF800000 : f32
      %47 = vector.broadcast %cst_29 : f32 to vector<8x1xf32>
      %c0_30 = arith.constant 0 : index
      %c0_31 = arith.constant 0 : index
      %48 = vector.load %arg7[%c0_30, %c0_31] : memref<8x1xf32, #tpu.memory_space<vmem>>, vector<8x1xf32>
      tpu.vector_store %arg7[%c0_30, %c0_31], %47 {strides = array<i32>} : memref<8x1xf32, #tpu.memory_space<vmem>>, vector<8x1xf32>,
      %cst_32 = arith.constant 0.000000e+00 : f32
      %49 = vector.broadcast %cst_32 : f32 to vector<8x1xf32>
      %c0_33 = arith.constant 0 : index
      %c0_34 = arith.constant 0 : index
      %50 = vector.load %arg8[%c0_33, %c0_34] : memref<8x1xf32, #tpu.memory_space<vmem>>, vector<8x1xf32>
      tpu.vector_store %arg8[%c0_33, %c0_34], %49 {strides = array<i32>} : memref<8x1xf32, #tpu.memory_space<vmem>>, vector<8x1xf32>,
      %cst_35 = arith.constant 0.000000e+00 : f32
      %51 = vector.broadcast %cst_35 : f32 to vector<8x1xf32>
      %c0_36 = arith.constant 0 : index
      %c0_37 = arith.constant 0 : index
      %52 = vector.load %arg9[%c0_36, %c0_37] : memref<8x1xf32, #tpu.memory_space<vmem>>, vector<8x1xf32>
      tpu.vector_store %arg9[%c0_36, %c0_37], %51 {strides = array<i32>} : memref<8x1xf32, #tpu.memory_space<vmem>>, vector<8x1xf32>,
      %cst_38 = arith.constant 0.000000e+00 : f32
      %53 = vector.broadcast %cst_38 : f32 to vector<8x1xf32>
      %c0_39 = arith.constant 0 : index
      %c0_40 = arith.constant 0 : index
      %54 = vector.load %arg10[%c0_39, %c0_40] : memref<8x1xf32, #tpu.memory_space<vmem>>, vector<8x1xf32>
      tpu.vector_store %arg10[%c0_39, %c0_40], %53 {strides = array<i32>} : memref<8x1xf32, #tpu.memory_space<vmem>>, vector<8x1xf32>,
    } else {
    }
    %c0 = arith.constant 0 : index
    %c0_1 = arith.constant 0 : index
    %3 = vector.load %arg4[%c0, %c0_1] : memref<8x16xf32, #tpu.memory_space<vmem>>, vector<8x16xf32>
    %c0_2 = arith.constant 0 : index
    %c0_3 = arith.constant 0 : index
    %4 = vector.load %arg2[%c0_2, %c0_3] : memref<8x1xi32, #tpu.memory_space<vmem>>, vector<8x1xi32>
    %c0_4 = arith.constant 0 : index
    %c0_5 = arith.constant 0 : index
    %5 = vector.load %arg3[%c0_4, %c0_5] : memref<1x16xf32, #tpu.memory_space<vmem>>, vector<1x16xf32>
    %6 = tpu.iota {dimensions = array<i32: 1>} : vector<8x16xi32>
    %c16_i32 = arith.constant 16 : i32
    %7 = arith.muli %arg1, %c16_i32 : i32
    %8 = vector.broadcast %7 : i32 to vector<8x1xi32>
    %9 = arith.subi %4, %8 : vector<8x1xi32>
    %10 = vector.broadcast %9 : vector<8x1xi32> to vector<8x16xi32>
    %11 = arith.cmpi eq, %6, %10 : vector<8x16xi32>
    %c0_6 = arith.constant 0 : index
    %c0_7 = arith.constant 0 : index
    %12 = vector.load %arg7[%c0_6, %c0_7] : memref<8x1xf32, #tpu.memory_space<vmem>>, vector<8x1xf32>
    %cst = arith.constant dense<0xFF800000> : vector<8xf32>
    %13 = vector.multi_reduction <maximumf>, %3, %cst [1] : vector<8x16xf32> to vector<8xf32>
    %14 = vector.shape_cast %13 : vector<8xf32> to vector<8x1xf32>
    %15 = arith.maximumf %12, %14 : vector<8x1xf32>
    %c0_8 = arith.constant 0 : index
    %c0_9 = arith.constant 0 : index
    %16 = vector.load %arg8[%c0_8, %c0_9] : memref<8x1xf32, #tpu.memory_space<vmem>>, vector<8x1xf32>
    %17 = arith.subf %12, %15 : vector<8x1xf32>
    %18 = math.exp %17 : vector<8x1xf32>
    %19 = arith.mulf %16, %18 : vector<8x1xf32>
    %20 = vector.broadcast %15 : vector<8x1xf32> to vector<8x16xf32>
    %21 = arith.subf %3, %20 : vector<8x16xf32>
    %22 = math.exp %21 : vector<8x16xf32>
    %cst_10 = arith.constant dense<0.000000e+00> : vector<8xf32>
    %23 = vector.multi_reduction <add>, %22, %cst_10 [1] : vector<8x16xf32> to vector<8xf32>
    %24 = vector.shape_cast %23 : vector<8xf32> to vector<8x1xf32>
    %25 = arith.addf %19, %24 : vector<8x1xf32>
    %c0_11 = arith.constant 0 : index
    %c0_12 = arith.constant 0 : index
    %26 = vector.load %arg8[%c0_11, %c0_12] : memref<8x1xf32, #tpu.memory_space<vmem>>, vector<8x1xf32>
    tpu.vector_store %arg8[%c0_11, %c0_12], %25 {strides = array<i32>} : memref<8x1xf32, #tpu.memory_space<vmem>>, vector<8x1xf32>,
    %c0_13 = arith.constant 0 : index
    %c0_14 = arith.constant 0 : index
    %27 = vector.load %arg7[%c0_13, %c0_14] : memref<8x1xf32, #tpu.memory_space<vmem>>, vector<8x1xf32>
    tpu.vector_store %arg7[%c0_13, %c0_14], %15 {strides = array<i32>} : memref<8x1xf32, #tpu.memory_space<vmem>>, vector<8x1xf32>,
    %c0_15 = arith.constant 0 : index
    %c0_16 = arith.constant 0 : index
    %28 = vector.load %arg9[%c0_15, %c0_16] : memref<8x1xf32, #tpu.memory_space<vmem>>, vector<8x1xf32>
    %cst_17 = arith.constant 0.000000e+00 : f32
    %29 = vector.broadcast %cst_17 : f32 to vector<8x16xf32>
    %30 = arith.select %11, %3, %29 : vector<8x16xi1>, vector<8x16xf32>
    %cst_18 = arith.constant dense<0.000000e+00> : vector<8xf32>
    %31 = vector.multi_reduction <add>, %30, %cst_18 [1] : vector<8x16xf32> to vector<8xf32>
    %32 = vector.shape_cast %31 : vector<8xf32> to vector<8x1xf32>
    %33 = arith.addf %28, %32 : vector<8x1xf32>
    %c0_19 = arith.constant 0 : index
    %c0_20 = arith.constant 0 : index
    %34 = vector.load %arg9[%c0_19, %c0_20] : memref<8x1xf32, #tpu.memory_space<vmem>>, vector<8x1xf32>
    tpu.vector_store %arg9[%c0_19, %c0_20], %33 {strides = array<i32>} : memref<8x1xf32, #tpu.memory_space<vmem>>, vector<8x1xf32>,
    %c0_21 = arith.constant 0 : index
    %c0_22 = arith.constant 0 : index
    %35 = vector.load %arg10[%c0_21, %c0_22] : memref<8x1xf32, #tpu.memory_space<vmem>>, vector<8x1xf32>
    %cst_23 = arith.constant 0.000000e+00 : f32
    %36 = vector.shape_cast %5 : vector<1x16xf32> to vector<1x16xf32>
    %37 = vector.broadcast %36 : vector<1x16xf32> to vector<8x16xf32>
    %38 = vector.broadcast %cst_23 : f32 to vector<8x16xf32>
    %39 = arith.select %11, %37, %38 : vector<8x16xi1>, vector<8x16xf32>
    %cst_24 = arith.constant dense<0.000000e+00> : vector<8xf32>
    %40 = vector.multi_reduction <add>, %39, %cst_24 [1] : vector<8x16xf32> to vector<8xf32>
    %41 = vector.shape_cast %40 : vector<8xf32> to vector<8x1xf32>
    %42 = arith.addf %35, %41 : vector<8x1xf32>
    %c0_25 = arith.constant 0 : index
    %c0_26 = arith.constant 0 : index
    %43 = vector.load %arg10[%c0_25, %c0_26] : memref<8x1xf32, #tpu.memory_space<vmem>>, vector<8x1xf32>
    tpu.vector_store %arg10[%c0_25, %c0_26], %42 {strides = array<i32>} : memref<8x1xf32, #tpu.memory_space<vmem>>, vector<8x1xf32>,
    %c0_i32_27 = arith.constant 0 : i32
    %44 = arith.cmpi eq, %arg1, %c0_i32_27 : i32
    %45 = arith.extui %44 : i1 to i32
    %c0_i32_28 = arith.constant 0 : i32
    %46 = arith.cmpi ne, %45, %c0_i32_28 : i32
    scf.if %46 {
      %c0_29 = arith.constant 0 : index
      %c0_30 = arith.constant 0 : index
      %47 = vector.load %arg7[%c0_29, %c0_30] : memref<8x1xf32, #tpu.memory_space<vmem>>, vector<8x1xf32>
      %c0_31 = arith.constant 0 : index
      %c0_32 = arith.constant 0 : index
      %48 = vector.load %arg8[%c0_31, %c0_32] : memref<8x1xf32, #tpu.memory_space<vmem>>, vector<8x1xf32>
      %49 = math.log %48 : vector<8x1xf32>
      %50 = arith.addf %47, %49 : vector<8x1xf32>
      %c0_33 = arith.constant 0 : index
      %c0_34 = arith.constant 0 : index
      %51 = vector.load %arg9[%c0_33, %c0_34] : memref<8x1xf32, #tpu.memory_space<vmem>>, vector<8x1xf32>
      %52 = arith.subf %50, %51 : vector<8x1xf32>
      %c0_35 = arith.constant 0 : index
      %c0_36 = arith.constant 0 : index
      %53 = vector.load %arg10[%c0_35, %c0_36] : memref<8x1xf32, #tpu.memory_space<vmem>>, vector<8x1xf32>
      %54 = arith.mulf %53, %52 : vector<8x1xf32>
      %c0_37 = arith.constant 0 : index
      %c0_38 = arith.constant 0 : index
      %55 = vector.load %arg10[%c0_37, %c0_38] : memref<8x1xf32, #tpu.memory_space<vmem>>, vector<8x1xf32>
      %c0_39 = arith.constant 0 : index
      %c0_40 = arith.constant 0 : index
      %56 = vector.load %arg5[%c0_39, %c0_40] : memref<8x1xf32, #tpu.memory_space<vmem>>, vector<8x1xf32>
      tpu.vector_store %arg5[%c0_39, %c0_40], %54 {strides = array<i32>} : memref<8x1xf32, #tpu.memory_space<vmem>>, vector<8x1xf32>,
      %c0_41 = arith.constant 0 : index
      %c0_42 = arith.constant 0 : index
      %57 = vector.load %arg6[%c0_41, %c0_42] : memref<8x1xf32, #tpu.memory_space<vmem>>, vector<8x1xf32>
      tpu.vector_store %arg6[%c0_41, %c0_42], %55 {strides = array<i32>} : memref<8x1xf32, #tpu.memory_space<vmem>>, vector<8x1xf32>,
    } else {
    }
    return
  }
  func.func @transform_0(%arg0: i32, %arg1: i32) -> (i32, i32) {
    %c0_i32 = arith.constant 0 : i32
    %c0_i32_0 = arith.constant 0 : i32
    return %arg0, %c0_i32 : i32, i32
  }
  func.func @transform_1(%arg0: i32, %arg1: i32) -> (i32, i32) {
    %c0_i32 = arith.constant 0 : i32
    %c0_i32_0 = arith.constant 0 : i32
    return %c0_i32, %arg1 : i32, i32
  }
  func.func @transform_2(%arg0: i32, %arg1: i32) -> (i32, i32) {
    %c0_i32 = arith.constant 0 : i32
    return %arg0, %arg1 : i32, i32
  }
  func.func @transform_3(%arg0: i32, %arg1: i32) -> (i32, i32) {
    %c0_i32 = arith.constant 0 : i32
    %c0_i32_0 = arith.constant 0 : i32
    return %arg0, %c0_i32 : i32, i32
  }
  func.func @transform_4(%arg0: i32, %arg1: i32) -> (i32, i32) {
    %c0_i32 = arith.constant 0 : i32
    %c0_i32_0 = arith.constant 0 : i32
    return %arg0, %c0_i32 : i32, i32
  }
}

</mosaic_0001>

<llo_original>
// kernel: tpu_custom_call.1
$region0: #{tpu_custom_call.1}
  #allocation0 [shape = 'u32[]', space=smem, size = 0x4, offset = 0x4, fixed_abs, tag = 'smem constant byte address 0x4 - core index']
  #allocation1 [shape = 'u32[144,128]{1,0:T(1,128)}', space=vmem, size = 0x12000, scoped, tag = 'internal scratch']
  #allocation2 [shape = 'f32[8,1]{1,0:T(8,128)}', space=vmem, size = 0x1000, scoped, tag = 'scratch operand']
  #allocation3 [shape = 'f32[8,1]{1,0:T(8,128)}', space=vmem, size = 0x1000, scoped, tag = 'scratch operand']
  #allocation4 [shape = 'f32[8,1]{1,0:T(8,128)}', space=vmem, size = 0x1000, scoped, tag = 'scratch operand']
  #allocation5 [shape = 'f32[8,1]{1,0:T(8,128)}', space=vmem, size = 0x1000, scoped, tag = 'scratch operand']
  %s0 = inlined_call_operand.vmem [shape: s32[8,1], index: 0, kind: input, shape index: {}]
  %s1 = inlined_call_operand.vmem [shape: f32[1,16], index: 1, kind: input, shape index: {}]
  %s2 = inlined_call_operand.vmem [shape: f32[8,16], index: 2, kind: input, shape index: {}]
  %s3 = inlined_call_operand.vmem [shape: f32[8,1], index: 3, kind: output, shape index: {0}]
  %s4 = inlined_call_operand.vmem [shape: f32[8,1], index: 4, kind: output, shape index: {1}]
  %5 = xla_tuple %s3, %s4
  %s6 = sld [smem:[#allocation0]]
  $region38: #{tpu_custom_call.1} parent=0
    _
  %s8 = ssub.s32 1, %s6
  %s9 = scalar_select 0, %s8, %s6
  // Predicated region
  $region2: #{tpu_custom_call.1} parent=0 // pred_check
    _
  $region3: #{tpu_custom_call.1} parent=0 // pred_check_branch
    %11 = sbr.rel (0) target = $region5
  $region4: #{tpu_custom_call.1} parent=0 // pred_region
    _
  $region5: #{tpu_custom_call.1} parent=0 // pred_fallthru
    _
  // Predicated region
  $region6: #{tpu_custom_call.1} parent=0 // pred_check
    _
  $region7: #{tpu_custom_call.1} parent=0 // pred_check_branch
    %13 = sbr.rel (0) target = $region9
  $region8: #{tpu_custom_call.1} parent=0 // pred_region
    _
  $region9: #{tpu_custom_call.1} parent=0 // pred_fallthru
    _
  // Predicated region
  $region10: #{tpu_custom_call.1} parent=0 // pred_check
    _
  $region11: #{tpu_custom_call.1} parent=0 // pred_check_branch
    %15 = sbr.rel (0) target = $region13
  $region12: #{tpu_custom_call.1} parent=0 // pred_region
    _
  $region13: #{tpu_custom_call.1} parent=0 // pred_fallthru
    _
  %p16 = scmp.eq.s32.totalorder 0, 0
  // Predicated region
  $region14: #{tpu_custom_call.1} parent=0 // pred_check
    %p17 = pneg %p16
  $region15: #{tpu_custom_call.1} parent=0 // pred_check_branch
    %19 = sbr.rel (%p17) target = $region17
  $region16: #{tpu_custom_call.1} parent=0 // pred_region
    %vm20 = vcmask 7168
    %21 = vst.msk [vmem:[#allocation2] sm:$0xff] %vm20, -inf
    %22 = vst.msk [vmem:[#allocation3] sm:$0xff] %vm20, 0.0
    %23 = vst.msk [vmem:[#allocation4] sm:$0xff] %vm20, 0.0
    %24 = vst.msk [vmem:[#allocation5] sm:$0xff] %vm20, 0.0
  $region17: #{tpu_custom_call.1} parent=0 // pred_fallthru
    _
  %v25 = vld [vmem:[%s2] sm:$0xff]
  %v26 = vld [vmem:[%s0] sm:$0xff]
  %v27 = vld [vmem:[%s1] sm:$0x1]
  %v28 = vlaneseq
  %v29 = vand.u32 %v28, 127
  %s30 = smul.u32 0, 16
  %v31 = vstv %s30
  %v32 = vsub.s32 %v26, %v31
  %33 = vset.pattern.permute.xlu0 0
  %34 = vperm.xlu0 %33, %v32
  %v35 = vpop.permute.xlu0 %34
  %vm36 = vcmp.eq.s32.totalorder %v29, %v35
  %v37 = vld [vmem:[#allocation2] sm:$0xff]
  %vm38 = vcmask 130048
  %v39 = vsel %vm38, %v25, -inf
  %40 = vmax.xlane.f32.xlu0 %v39
  %v41 = vpop.xlane.xlu0 %40
  %v42 = vmax.f32 %v37, %v41
  %v43 = vld [vmem:[#allocation3] sm:$0xff]
  %v44 = vsub.f32 %v37, %v42
  %v45 = vmul.f32 %v44, 1.442695
  %v46 = vpow.pop %v45
  %v47 = vmul.f32 %v43, %v46
  %49 = vset.pattern.permute.xlu0 0
  %50 = vperm.xlu0 %49, %v42
  %v51 = vpop.permute.xlu0 %50
  %v53 = vsub.f32 %v25, %v51
  %v54 = vmul.f32 %v53, 1.442695
  %v55 = vpow.pop %v54
  %v56 = vsel %vm38, %v55, 0.0
  %57 = vadd.xlane.f32.xlu0 %v56
  %v58 = vpop.xlane.xlu0 %57
  %v59 = vadd.f32 %v47, %v58
  %vm60 = vcmask 7168
  %61 = vst.msk [vmem:[#allocation3] sm:$0xff] %vm60, %v59
  %62 = vst.msk [vmem:[#allocation2] sm:$0xff] %vm60, %v42
  %v63 = vld [vmem:[#allocation4] sm:$0xff]
  %v64 = vsel %vm36, %v25, 0.0
  %v65 = vsel %vm38, %v64, 0.0
  %66 = vadd.xlane.f32.xlu0 %v65
  %v67 = vpop.xlane.xlu0 %66
  %v68 = vadd.f32 %v63, %v67
  %69 = vst.msk [vmem:[#allocation4] sm:$0xff] %vm60, %v68
  %v70 = vld [vmem:[#allocation5] sm:$0xff]
  %v72 = vlaneseq
  %v73 = vshrl.u32 %v72, 7
  %v74 = vsub.s32 0, %v73
  %v75 = vrot.slane %v27, %v74
  %v77 = vsel %vm36, %v75, 0.0
  %v78 = vsel %vm38, %v77, 0.0
  %79 = vadd.xlane.f32.xlu0 %v78
  %v80 = vpop.xlane.xlu0 %79
  %v81 = vadd.f32 %v70, %v80
  %82 = vst.msk [vmem:[#allocation5] sm:$0xff] %vm60, %v81
  // Predicated region
  $region18: #{tpu_custom_call.1} parent=0 // pred_check
    %p83 = pneg %p16
  $region19: #{tpu_custom_call.1} parent=0 // pred_check_branch
    %85 = sbr.rel (%p83) target = $region21
  $region20: #{tpu_custom_call.1} parent=0 // pred_region
    %v86 = vld [vmem:[#allocation2] sm:$0xff]
    %v87 = vld [vmem:[#allocation3] sm:$0xff]
    %v88 = vlog2.pop %v87
    %v89 = vmul.f32 %v88, 0.6931472
    %v90 = vadd.f32 %v86, %v89
    %v91 = vld [vmem:[#allocation4] sm:$0xff]
    %v92 = vsub.f32 %v90, %v91
    %v93 = vld [vmem:[#allocation5] sm:$0xff]
    %v94 = vmul.f32 %v93, %v92
    %95 = vst.msk [vmem:[%s3] sm:$0xff] %vm60, %v94
    %96 = vst.msk [vmem:[%s4] sm:$0xff] %vm60, %v93
  $region21: #{tpu_custom_call.1} parent=0 // pred_fallthru
    _
  // Predicated region
  $region22: #{tpu_custom_call.1} parent=0 // pred_check
    _
  $region23: #{tpu_custom_call.1} parent=0 // pred_check_branch
    %98 = sbr.rel (0) target = $region25
  $region24: #{tpu_custom_call.1} parent=0 // pred_region
    _
  $region25: #{tpu_custom_call.1} parent=0 // pred_fallthru
    _
  // Predicated region
  $region26: #{tpu_custom_call.1} parent=0 // pred_check
    _
  $region27: #{tpu_custom_call.1} parent=0 // pred_check_branch
    %100 = sbr.rel (0) target = $region29
  $region28: #{tpu_custom_call.1} parent=0 // pred_region
    _
  $region29: #{tpu_custom_call.1} parent=0 // pred_fallthru
    _
  // Predicated region
  $region30: #{tpu_custom_call.1} parent=0 // pred_check
    _
  $region31: #{tpu_custom_call.1} parent=0 // pred_check_branch
    %102 = sbr.rel (0) target = $region33
  $region32: #{tpu_custom_call.1} parent=0 // pred_region
    _
  $region33: #{tpu_custom_call.1} parent=0 // pred_fallthru
    _
  // Predicated region
  $region34: #{tpu_custom_call.1} parent=0 // pred_check
    _
  $region35: #{tpu_custom_call.1} parent=0 // pred_check_branch
    %104 = sbr.rel (0) target = $region37
  $region36: #{tpu_custom_call.1} parent=0 // pred_region
    _
  $region37: #{tpu_custom_call.1} parent=0 // pred_fallthru
    _

</llo_original>
